<compile_context>
chip_gen: v7x
topology: tpu7x:2x2x1
jax: 0.10.0
libtpu: 0.0.40
codegen_flags: <defaults>
</compile_context>

<pallas_src>
import jax
import jax.numpy as jnp
from jax.experimental import pallas as pl
from jax.experimental.pallas import tpu as pltpu

LANE = 128
SUBLANE = 8
_PAD_CHUNK = SUBLANE * LANE  # 1024 elements = one f32 vreg


def _scale_kernel(scale_ref, x_ref, o_ref):
    # scale_ref: SMEM (1,) f32 scalar parameter
    # x_ref / o_ref: VMEM tile of shape (tile_rows, 128), same dtype as the input
    s = scale_ref[0].astype(x_ref.dtype)      # one scalar cast, math stays in x.dtype
    o_ref[...] = x_ref[...] * s


def scale_forward(x, scale_param, *, tile_rows=1024):
    """Multiply x (any shape) by the learnable scalar scale_param."""
    orig_shape = x.shape
    orig_dtype = x.dtype
    n = x.size

    # Learnable scale parameter -> f32 scalar of shape (1,) for SMEM.
    scale_param = jnp.asarray(scale_param, dtype=jnp.float32).reshape(1)

    flat = x.reshape(-1)
    n_pad = (-n) % _PAD_CHUNK
    padded = n_pad > 0
    if padded:
        # Rare path: pad only up to the next vreg boundary (<1024 extra elems).
        flat = jnp.pad(flat, (0, n_pad))
    rows = flat.shape[0] // LANE              # always a multiple of SUBLANE (8)
    x2d = flat.reshape(rows, LANE)

    # Clamp the tile to the real row count so small inputs use one full block
    # with no padding traffic and no grid overhead. rows and the default are
    # multiples of 8, so tile_rows stays sublane-aligned.
    tile_rows = min(tile_rows, rows)
    grid = (pl.cdiv(rows, tile_rows),)

    out2d = pl.pallas_call(
        _scale_kernel,
        out_shape=jax.ShapeDtypeStruct((rows, LANE), orig_dtype),
        grid_spec=pltpu.PrefetchScalarGridSpec(
            num_scalar_prefetch=0,
            grid=grid,
            in_specs=[
                pl.BlockSpec(memory_space=pltpu.SMEM),              # scale (1,) f32
                pl.BlockSpec((tile_rows, LANE), lambda i: (i, 0)),  # x tile
            ],
            out_specs=pl.BlockSpec((tile_rows, LANE), lambda i: (i, 0)),
        ),
        compiler_params=pltpu.CompilerParams(
            dimension_semantics=("parallel",),
        ),
    )(scale_param, x2d)

    if padded:
        out = out2d.reshape(-1)[:n].reshape(orig_shape)
    else:
        # Fast path: no slice, just a free reshape.
        out = out2d.reshape(orig_shape)
    return out


if __name__ == "__main__":
    key = jax.random.PRNGKey(0)

    # Example NCHW input like a conv feature map.
    x = jax.random.normal(key, (2, 4, 16, 16), dtype=jnp.float32)

    # Scale(scale=1.0) initializes the parameter to 1.0; use a non-trivial
    # value to exercise the multiply meaningfully.
    init_scale = 1.5
    scale_param = jnp.array([init_scale], dtype=jnp.float32)  # shape (1,)

    y = scale_forward(x, scale_param)
    y = jax.block_until_ready(y)

    ref = x * init_scale
    assert y.shape == x.shape and y.dtype == x.dtype
    assert jnp.allclose(y, ref, atol=1e-6, rtol=1e-6)

    # Also exercise the bf16 path (math stays in bf16, store dtype matches).
    x_bf16 = x.astype(jnp.bfloat16)
    y_bf16 = jax.block_until_ready(scale_forward(x_bf16, scale_param))
    ref_bf16 = (x_bf16 * jnp.bfloat16(init_scale)).astype(jnp.bfloat16)
    assert y_bf16.dtype == jnp.bfloat16
    assert jnp.allclose(y_bf16.astype(jnp.float32),
                        ref_bf16.astype(jnp.float32), atol=1e-2, rtol=1e-2)

    # And a shape that is NOT a multiple of 1024 elements (padded path).
    x_odd = jax.random.normal(jax.random.PRNGKey(1), (3, 5, 7), dtype=jnp.float32)
    y_odd = jax.block_until_ready(scale_forward(x_odd, scale_param))
    assert y_odd.shape == x_odd.shape
    assert jnp.allclose(y_odd, x_odd * init_scale, atol=1e-6, rtol=1e-6)

    print("KERNEL_OK")
</pallas_src>

<mosaic_0001>
module attributes {stable_mosaic.version = 11 : i64} {
  func.func @_scale_kernel(%arg0: i32, %arg1: memref<1xf32, #tpu.memory_space<smem>>, %arg2: memref<16x128xf32, #tpu.memory_space<vmem>>, %arg3: memref<16x128xf32, #tpu.memory_space<vmem>>) attributes {dimension_semantics = [#tpu.dimension_semantics<parallel>], iteration_bounds = array<i64: 1>, scalar_prefetch = 0 : i64, scratch_operands = 0 : i64, tpu.core_type = #tpu.core_type<tc>, window_params = [{transform_indices = @transform_0, window_bounds = array<i64: 1>}, {transform_indices = @transform_1, window_bounds = array<i64: 16, 128>}, {transform_indices = @transform_2, window_bounds = array<i64: 16, 128>}]} {
    %c0 = arith.constant 0 : index
    %0 = memref.load %arg1[%c0] : memref<1xf32, #tpu.memory_space<smem>>
    %c0_0 = arith.constant 0 : index
    %c0_1 = arith.constant 0 : index
    %1 = vector.load %arg2[%c0_0, %c0_1] : memref<16x128xf32, #tpu.memory_space<vmem>>, vector<16x128xf32>
    %2 = vector.broadcast %0 : f32 to vector<16x128xf32>
    %3 = arith.mulf %1, %2 : vector<16x128xf32>
    %c0_2 = arith.constant 0 : index
    %c0_3 = arith.constant 0 : index
    %4 = vector.load %arg3[%c0_2, %c0_3] : memref<16x128xf32, #tpu.memory_space<vmem>>, vector<16x128xf32>
    tpu.vector_store %arg3[%c0_2, %c0_3], %3 {strides = array<i32>} : memref<16x128xf32, #tpu.memory_space<vmem>>, vector<16x128xf32>,
    return
  }
  func.func @transform_0(%arg0: i32) -> i32 {
    %c0_i32 = arith.constant 0 : i32
    %c0_i32_0 = arith.constant 0 : i32
    return %c0_i32 : i32
  }
  func.func @transform_1(%arg0: i32) -> (i32, i32) {
    %c0_i32 = arith.constant 0 : i32
    %c0_i32_0 = arith.constant 0 : i32
    return %arg0, %c0_i32 : i32, i32
  }
  func.func @transform_2(%arg0: i32) -> (i32, i32) {
    %c0_i32 = arith.constant 0 : i32
    %c0_i32_0 = arith.constant 0 : i32
    return %arg0, %c0_i32 : i32, i32
  }
}

</mosaic_0001>

<llo_original>
// kernel: tpu_custom_call.1
$region0: #{tpu_custom_call.1}
  #allocation0 [shape = 'u32[]', space=smem, size = 0x4, offset = 0x4, fixed_abs, tag = 'smem constant byte address 0x4 - core index']
  #allocation1 [shape = 'u32[144,128]{1,0:T(1,128)}', space=vmem, size = 0x12000, scoped, tag = 'internal scratch']
  #allocation2 [shape = 'f32[1]{0:T(128)S(6)}', space=smem, size = 0x200, scoped, tag = 'scoped memory for tpu_custom_call.1']
  %s0 = inlined_call_operand.<no memory space> [shape: f32[1], index: 0, kind: input, shape index: {}]
  %s1 = inlined_call_operand.hbm [shape: f32[16,128], index: 1, kind: input, shape index: {}]
  %s2 = inlined_call_operand.hbm [shape: f32[16,128], index: 2, kind: output, shape index: {}]
  %s3 = sld [smem:[#allocation0]]
  $region22: #{tpu_custom_call.1} parent=0
    _
  %s5 = ssub.s32 1, %s3
  %s6 = scalar_select 0, %s5, %s3
  %7 = sst [smem:[#allocation2]] %s0
  $region1: #{tpu_custom_call.1} parent=0
    #allocation3 [shape = 'u8[8192]{0}', space=vmem, size = 0x2000, scoped, tag = 'input window, operand 1, single buffered']
    #allocation4 [shape = 's32[1]{0}', space=sflag, size = 0x4, scoped, tag = 'scoped memory for tpu_custom_call.1']
    #allocation5 [shape = 's32[1]{0}', space=sflag, size = 0x4, scoped, tag = 'scoped memory for tpu_custom_call.1']
    #allocation6 [shape = 'u8[8192]{0}', space=vmem, size = 0x2000, scoped, tag = 'output window, operand 0, single buffered']
    %8 = vsyncpa [#allocation4], 0
    %9 = vsyncpa [#allocation5], 0
    // Predicated region
    $region2: #{tpu_custom_call.1} parent=1 // pred_check
      _
    $region3: #{tpu_custom_call.1} parent=1 // pred_check_branch
      %11 = sbr.rel (0) target = $region5
    $region4: #{tpu_custom_call.1} parent=1 // pred_region
      _
    $region5: #{tpu_custom_call.1} parent=1 // pred_fallthru
      _
    // Predicated region
    $region6: #{tpu_custom_call.1} parent=1 // pred_check
      _
    $region7: #{tpu_custom_call.1} parent=1 // pred_check_branch
      %13 = sbr.rel (0) target = $region9
    $region8: #{tpu_custom_call.1} parent=1 // pred_region
      %s15 = ssub.s32 256, 256
      %16 = vsyncadd [#allocation4], %s15
      %s17 = sshll.u32 [#allocation3], 4
      %s18 = int_to_ptr.vmem [resolvable:$true] %s17
      %23 = dma.hbm_to_vmem [thread:$0]  %s1, 256, %s18, [#allocation4], 128, 128, 8
    $region9: #{tpu_custom_call.1} parent=1 // pred_fallthru
      _
    // Predicated region
    $region10: #{tpu_custom_call.1} parent=1 // pred_check
      _
    $region11: #{tpu_custom_call.1} parent=1 // pred_check_branch
      %25 = sbr.rel (0) target = $region13
    $region12: #{tpu_custom_call.1} parent=1 // pred_region
      %26 = dma.done [#allocation4], 256
    $region13: #{tpu_custom_call.1} parent=1 // pred_fallthru
      _
    %s27 = sld [smem:[#allocation2]]
    %v28 = vld [vmem:[#allocation3] sm:$0xff]
    %v29 = vld [vmem:[#allocation3 + $0x8] sm:$0xff]
    %v30 = vstv %s27
    %v31 = vmul.f32 %v28, %v30
    %v32 = vmul.f32 %v29, %v30
    %33 = vst [vmem:[#allocation6] sm:$0xff] %v31
    %34 = vst [vmem:[#allocation6 + $0x8] sm:$0xff] %v32
    // Predicated region
    $region14: #{tpu_custom_call.1} parent=1 // pred_check
      _
    $region15: #{tpu_custom_call.1} parent=1 // pred_check_branch
      %36 = sbr.rel (0) target = $region17
    $region16: #{tpu_custom_call.1} parent=1 // pred_region
      %s38 = ssub.s32 256, 256
      %39 = vsyncadd [#allocation5], %s38
      %s40 = sshll.u32 [#allocation6], 4
      %s41 = int_to_ptr.vmem [resolvable:$true] %s40
      %46 = dma.vmem_to_hbm [thread:$0]  %s41, 256, %s2, [#allocation5], 128, 128, 8
    $region17: #{tpu_custom_call.1} parent=1 // pred_fallthru
      _
    // Predicated region
    $region18: #{tpu_custom_call.1} parent=1 // pred_check
      _
    $region19: #{tpu_custom_call.1} parent=1 // pred_check_branch
      %48 = sbr.rel (0) target = $region21
    $region20: #{tpu_custom_call.1} parent=1 // pred_region
      %49 = dma.done [#allocation5], 256
    $region21: #{tpu_custom_call.1} parent=1 // pred_fallthru
      _
    %50 = vsyncpa [#allocation4], 1
    %51 = vsyncpa [#allocation5], 1

</llo_original>
